<compile_context>
chip_gen: v6e
topology: v6e:2x2x1
jax: 0.10.0
libtpu: 0.0.40
codegen_flags: <defaults>
</compile_context>

<pallas_src>
import jax
import jax.numpy as jnp
from jax import lax
from jax.experimental import pallas as pl
from jax.experimental.pallas import tpu as pltpu

EPS = 1e-5


def critic_kernel(s_ref, a_ref,
                  w1_ref, w2s_ref, w2a_ref,
                  w3_ref, b3_ref,
                  o_ref):
    f32 = jnp.float32

    # actions @ W2_a issued first: K=4 MXU pass with no dependence on the
    # bn1/relu chain, so it is not serialized behind that data dependency.
    h2_a = jnp.dot(a_ref[...].astype(w2a_ref.dtype), w2a_ref[...],
                   preferred_element_type=f32)

    # ---- fc_1: states @ W1  (b1 cancels exactly under train-mode BN) -------
    h1 = jnp.dot(s_ref[...].astype(w1_ref.dtype), w1_ref[...],
                 preferred_element_type=f32)

    # ---- bn1 (two-pass batch variance, f32 VPU/XLU math) + relu ------------
    mu1 = jnp.mean(h1, axis=0, keepdims=True)
    d1 = h1 - mu1
    var1 = jnp.mean(d1 * d1, axis=0, keepdims=True)
    x1 = jnp.maximum(d1 * lax.rsqrt(var1 + EPS), 0.0)

    # ---- fc_2 on concat([x1, actions]) == split matmul (b2 cancels) --------
    h2 = jnp.dot(x1.astype(w2s_ref.dtype), w2s_ref[...],
                 preferred_element_type=f32) + h2_a

    # ---- bn2 + relu ---------------------------------------------------------
    mu2 = jnp.mean(h2, axis=0, keepdims=True)
    d2 = h2 - mu2
    var2 = jnp.mean(d2 * d2, axis=0, keepdims=True)
    x2 = jnp.maximum(d2 * lax.rsqrt(var2 + EPS), 0.0)

    # ---- fc_out: N=1 -> VPU multiply + lane reduction; scalar bias from SMEM
    q = jnp.sum(x2 * w3_ref[...], axis=-1, keepdims=True)        # (B, 1)
    o_ref[...] = q + b3_ref[0]
    # TODO(synk): for B in the thousands, emit q into a lane-dense
    # (ceil(B/128), 128) slab and reshape in the wrapper to avoid masked
    # vst.msk partial stores on the (B, 1) output.


def _critic_forward(states, actions, params):
    """states: (B, state_size) f32, actions: (B, action_size) f32 -> (B, 1) f32."""
    if states.ndim == 1:                 # mimic states.unsqueeze(0)
        # NOTE: PyTorch BatchNorm1d in .train() raises for batch==1; here the
        # normalized activations collapse to 0 and the output becomes b3.
        states = states[None, :]
    if actions.ndim == 1:
        actions = actions[None, :]
    B, state_size = states.shape
    action_size = actions.shape[1]
    fc_1 = params["w1"].shape[1]
    fc_2 = params["w2_s"].shape[1]

    # Advisory cost estimate: lets XLA overlap surrounding ops (the rest of a
    # jitted DDPG step) with this kernel -- the ~132 KiB weight DMA is on the
    # same order as the whole kernel's compute, so hiding it is the real win.
    flops = (2 * B * (state_size * fc_1 + (fc_1 + action_size) * fc_2 + fc_2)
             + 10 * B * (fc_1 + fc_2))
    bytes_accessed = 4 * (B * (state_size + action_size + 1)
                          + state_size * fc_1
                          + (fc_1 + action_size) * fc_2
                          + fc_2 + 1)
    cost = pl.CostEstimate(flops=flops,
                           transcendentals=fc_1 + fc_2,      # rsqrt per feature
                           bytes_accessed=bytes_accessed)

    vmem = pl.BlockSpec(memory_space=pltpu.MemorySpace.VMEM)
    smem = pl.BlockSpec(memory_space=pltpu.MemorySpace.SMEM)

    # Single ungridded call: weights (~132 KiB) + f32 activations (~4-6 KiB per
    # batch row) fit comfortably in scoped VMEM at this size.  This caps out
    # around B ~ 5-8k under the default 32 MiB scoped limit; the physical
    # ceiling on v7x is 64 MiB (not 128 MiB as on v5e/v6e).
    # TODO(synk): for large-batch serving/training, add a batch grid with a
    # two-pass BN (stat-accumulation pass over an "arbitrary" batch axis, then
    # a normalize pass, or a CMEM/VMEM_SHARED stat exchange) -- only then is
    # dimension_semantics=("parallel",) correct, and only v7x (2 TCs) gains.
    # TODO(synk): if launched standalone in a tight loop, prefetch the weights
    # via a cross-call DMA future (P10) instead of re-DMAing them every call.
    return pl.pallas_call(
        critic_kernel,
        out_shape=jax.ShapeDtypeStruct((B, 1), jnp.float32),
        in_specs=[vmem, vmem, vmem, vmem, vmem, vmem, smem],
        out_specs=vmem,
        cost_estimate=cost,
    )(states, actions,
      params["w1"], params["w2_s"], params["w2_a"],
      params["w3_row"], params["b3"])


critic_forward = jax.jit(_critic_forward)


def init_params(key, state_size, action_size, fc_1, fc_2,
                weights_dtype=jnp.float32):
    """Deterministic init mirroring the module's reset_parameters ranges.

    hidden_init uses weight.size()[0] == out_features, so lim = 1/sqrt(out)
    for fc_1 / fc_2.  Linear biases keep PyTorch's default U(+-1/sqrt(fan_in)).
    Returns (kernel_params, reference_params).  b1/b2 exist only in the
    reference params (they cancel under train-mode BN and are not fed to the
    kernel).  `weights_dtype` defaults to f32: compute is free at this size
    and f32 removes the bf16 quantization deviation (set bf16 to save HBM
    traffic for very large hidden dims).
    """
    ks = jax.random.split(key, 6)
    lim1 = 1.0 / jnp.sqrt(jnp.float32(fc_1))
    lim2 = 1.0 / jnp.sqrt(jnp.float32(fc_2))

    w1 = jax.random.uniform(ks[0], (state_size, fc_1), jnp.float32, -lim1, lim1)
    w2 = jax.random.uniform(ks[1], (fc_1 + action_size, fc_2), jnp.float32,
                            -lim2, lim2)
    w3 = jax.random.uniform(ks[2], (fc_2, 1), jnp.float32, -0.003, 0.003)

    blim1 = 1.0 / jnp.sqrt(jnp.float32(state_size))
    blim2 = 1.0 / jnp.sqrt(jnp.float32(fc_1 + action_size))
    blim3 = 1.0 / jnp.sqrt(jnp.float32(fc_2))
    b1 = jax.random.uniform(ks[3], (1, fc_1), jnp.float32, -blim1, blim1)
    b2 = jax.random.uniform(ks[4], (1, fc_2), jnp.float32, -blim2, blim2)
    b3 = jax.random.uniform(ks[5], (1, 1), jnp.float32, -blim3, blim3)

    kernel_params = {
        "w1": w1.astype(weights_dtype),
        "w2_s": w2[:fc_1, :].astype(weights_dtype),
        "w2_a": w2[fc_1:, :].astype(weights_dtype),
        "w3_row": jnp.transpose(w3),     # (1, fc_2) f32, used on the VPU path
        "b3": b3.reshape((1,)),          # (1,) f32 scalar, lives in SMEM
    }
    ref_params = {"w1": w1, "b1": b1, "w2": w2, "b2": b2, "w3": w3, "b3": b3}
    return kernel_params, ref_params


def critic_reference_kernel_math(states, actions, p):
    """Pure-JAX replica of the exact kernel math (split matmul, no b1/b2,
    two-pass variance), with full-f32 dot precision."""
    hp = jax.lax.Precision.HIGHEST
    f32 = jnp.float32
    h1 = jnp.dot(states.astype(p["w1"].dtype), p["w1"],
                 precision=hp, preferred_element_type=f32)
    mu1 = h1.mean(0, keepdims=True)
    d1 = h1 - mu1
    var1 = (d1 * d1).mean(0, keepdims=True)
    x1 = jnp.maximum(d1 * lax.rsqrt(var1 + EPS), 0.0)
    h2 = (jnp.dot(x1.astype(p["w2_s"].dtype), p["w2_s"],
                  precision=hp, preferred_element_type=f32)
          + jnp.dot(actions.astype(p["w2_a"].dtype), p["w2_a"],
                    precision=hp, preferred_element_type=f32))
    mu2 = h2.mean(0, keepdims=True)
    d2 = h2 - mu2
    var2 = (d2 * d2).mean(0, keepdims=True)
    x2 = jnp.maximum(d2 * lax.rsqrt(var2 + EPS), 0.0)
    return jnp.sum(x2 * p["w3_row"], axis=-1, keepdims=True) + p["b3"][0]


def critic_reference_module(states, actions, rp):
    """Full-f32, bias-included reference == PyTorch module forward in .train()
    (gamma=1, beta=0, eps=1e-5, batch statistics)."""
    hp = jax.lax.Precision.HIGHEST
    h1 = jnp.dot(states, rp["w1"], precision=hp) + rp["b1"]
    mu1 = h1.mean(0, keepdims=True)
    var1 = ((h1 - mu1) ** 2).mean(0, keepdims=True)
    x1 = jnp.maximum((h1 - mu1) / jnp.sqrt(var1 + EPS), 0.0)
    h2 = jnp.dot(jnp.concatenate([x1, actions], axis=1), rp["w2"],
                 precision=hp) + rp["b2"]
    mu2 = h2.mean(0, keepdims=True)
    var2 = ((h2 - mu2) ** 2).mean(0, keepdims=True)
    x2 = jnp.maximum((h2 - mu2) / jnp.sqrt(var2 + EPS), 0.0)
    return jnp.dot(x2, rp["w3"], precision=hp) + rp["b3"]


if __name__ == "__main__":
    # Small, deterministic problem instance (module-default hidden sizes).
    batch, state_size, action_size = 16, 33, 4
    fc_1, fc_2 = 256, 256          # lane-dense hidden dims (module defaults)

    key = jax.random.PRNGKey(0)
    k_s, k_a, k_p = jax.random.split(key, 3)
    states = jax.random.normal(k_s, (batch, state_size), jnp.float32)
    actions = jax.random.normal(k_a, (batch, action_size), jnp.float32)
    kparams, rparams = init_params(k_p, state_size, action_size, fc_1, fc_2)

    out = jax.block_until_ready(critic_forward(states, actions, kparams))
    assert out.shape == (batch, 1), out.shape

    # Exact-math check (same split-matmul / no-bias / two-pass-var math).
    ref_exact = critic_reference_kernel_math(states, actions, kparams)
    assert jnp.allclose(out, ref_exact, atol=2e-3, rtol=2e-3), (
        "kernel-math mismatch", float(jnp.max(jnp.abs(out - ref_exact))))

    # Module-semantics check (full f32, biases included -> they cancel under
    # train-mode BN; weights are now f32 so parity is tight).
    ref_module = critic_reference_module(states, actions, rparams)
    assert jnp.allclose(out, ref_module, atol=2e-3, rtol=2e-3), (
        "module-semantics mismatch", float(jnp.max(jnp.abs(out - ref_module))))

    print("KERNEL_OK")
</pallas_src>

<mosaic_0001>
module attributes {stable_mosaic.version = 11 : i64} {
  func.func @critic_kernel(%arg0: memref<16x33xf32, #tpu.memory_space<vmem>>, %arg1: memref<16x4xf32, #tpu.memory_space<vmem>>, %arg2: memref<33x256xf32, #tpu.memory_space<vmem>>, %arg3: memref<256x256xf32, #tpu.memory_space<vmem>>, %arg4: memref<4x256xf32, #tpu.memory_space<vmem>>, %arg5: memref<1x256xf32, #tpu.memory_space<vmem>>, %arg6: memref<1xf32, #tpu.memory_space<smem>>, %arg7: memref<16x1xf32, #tpu.memory_space<vmem>>) attributes {dimension_semantics = [], scalar_prefetch = 0 : i64, scratch_operands = 0 : i64, tpu.core_type = #tpu.core_type<tc>} {
    %c0 = arith.constant 0 : index
    %c0_0 = arith.constant 0 : index
    %0 = vector.load %arg1[%c0, %c0_0] : memref<16x4xf32, #tpu.memory_space<vmem>>, vector<16x4xf32>
    %c0_1 = arith.constant 0 : index
    %c0_2 = arith.constant 0 : index
    %1 = vector.load %arg4[%c0_1, %c0_2] : memref<4x256xf32, #tpu.memory_space<vmem>>, vector<4x256xf32>
    %cst = arith.constant dense<0.000000e+00> : vector<16x256xf32>
    %2 = tpu.matmul %0, %1, %cst {dimension_numbers = #tpu.dot_dimension_numbers<[1], [0], [0], [1], [0, 0, 1, 1], [], []>} : vector<16x4xf32>, vector<4x256xf32>, vector<16x256xf32> -> vector<16x256xf32>
    %c0_3 = arith.constant 0 : index
    %c0_4 = arith.constant 0 : index
    %3 = vector.load %arg0[%c0_3, %c0_4] : memref<16x33xf32, #tpu.memory_space<vmem>>, vector<16x33xf32>
    %c0_5 = arith.constant 0 : index
    %c0_6 = arith.constant 0 : index
    %4 = vector.load %arg2[%c0_5, %c0_6] : memref<33x256xf32, #tpu.memory_space<vmem>>, vector<33x256xf32>
    %cst_7 = arith.constant dense<0.000000e+00> : vector<16x256xf32>
    %5 = tpu.matmul %3, %4, %cst_7 {dimension_numbers = #tpu.dot_dimension_numbers<[1], [0], [0], [1], [0, 0, 1, 1], [], []>} : vector<16x33xf32>, vector<33x256xf32>, vector<16x256xf32> -> vector<16x256xf32>
    %cst_8 = arith.constant dense<0.000000e+00> : vector<256xf32>
    %6 = vector.multi_reduction <add>, %5, %cst_8 [0] : vector<16x256xf32> to vector<256xf32>
    %7 = vector.shape_cast %6 : vector<256xf32> to vector<1x256xf32>
    %cst_9 = arith.constant 1.600000e+01 : f32
    %8 = vector.broadcast %cst_9 : f32 to vector<1x256xf32>
    %9 = arith.divf %7, %8 : vector<1x256xf32>
    %10 = vector.broadcast %9 : vector<1x256xf32> to vector<16x256xf32>
    %11 = arith.subf %5, %10 : vector<16x256xf32>
    %12 = arith.mulf %11, %11 : vector<16x256xf32>
    %cst_10 = arith.constant dense<0.000000e+00> : vector<256xf32>
    %13 = vector.multi_reduction <add>, %12, %cst_10 [0] : vector<16x256xf32> to vector<256xf32>
    %14 = vector.shape_cast %13 : vector<256xf32> to vector<1x256xf32>
    %cst_11 = arith.constant 1.600000e+01 : f32
    %15 = vector.broadcast %cst_11 : f32 to vector<1x256xf32>
    %16 = arith.divf %14, %15 : vector<1x256xf32>
    %cst_12 = arith.constant 9.99999974E-6 : f32
    %17 = vector.broadcast %cst_12 : f32 to vector<1x256xf32>
    %18 = arith.addf %16, %17 : vector<1x256xf32>
    %19 = math.rsqrt %18 : vector<1x256xf32>
    %20 = vector.broadcast %19 : vector<1x256xf32> to vector<16x256xf32>
    %21 = arith.mulf %11, %20 : vector<16x256xf32>
    %cst_13 = arith.constant 0.000000e+00 : f32
    %22 = vector.broadcast %cst_13 : f32 to vector<16x256xf32>
    %23 = arith.maximumf %21, %22 : vector<16x256xf32>
    %c0_14 = arith.constant 0 : index
    %c0_15 = arith.constant 0 : index
    %24 = vector.load %arg3[%c0_14, %c0_15] : memref<256x256xf32, #tpu.memory_space<vmem>>, vector<256x256xf32>
    %cst_16 = arith.constant dense<0.000000e+00> : vector<16x256xf32>
    %25 = tpu.matmul %23, %24, %cst_16 {dimension_numbers = #tpu.dot_dimension_numbers<[1], [0], [0], [1], [0, 0, 1, 1], [], []>} : vector<16x256xf32>, vector<256x256xf32>, vector<16x256xf32> -> vector<16x256xf32>
    %26 = arith.addf %25, %2 : vector<16x256xf32>
    %cst_17 = arith.constant dense<0.000000e+00> : vector<256xf32>
    %27 = vector.multi_reduction <add>, %26, %cst_17 [0] : vector<16x256xf32> to vector<256xf32>
    %28 = vector.shape_cast %27 : vector<256xf32> to vector<1x256xf32>
    %cst_18 = arith.constant 1.600000e+01 : f32
    %29 = vector.broadcast %cst_18 : f32 to vector<1x256xf32>
    %30 = arith.divf %28, %29 : vector<1x256xf32>
    %31 = vector.broadcast %30 : vector<1x256xf32> to vector<16x256xf32>
    %32 = arith.subf %26, %31 : vector<16x256xf32>
    %33 = arith.mulf %32, %32 : vector<16x256xf32>
    %cst_19 = arith.constant dense<0.000000e+00> : vector<256xf32>
    %34 = vector.multi_reduction <add>, %33, %cst_19 [0] : vector<16x256xf32> to vector<256xf32>
    %35 = vector.shape_cast %34 : vector<256xf32> to vector<1x256xf32>
    %cst_20 = arith.constant 1.600000e+01 : f32
    %36 = vector.broadcast %cst_20 : f32 to vector<1x256xf32>
    %37 = arith.divf %35, %36 : vector<1x256xf32>
    %cst_21 = arith.constant 9.99999974E-6 : f32
    %38 = vector.broadcast %cst_21 : f32 to vector<1x256xf32>
    %39 = arith.addf %37, %38 : vector<1x256xf32>
    %40 = math.rsqrt %39 : vector<1x256xf32>
    %41 = vector.broadcast %40 : vector<1x256xf32> to vector<16x256xf32>
    %42 = arith.mulf %32, %41 : vector<16x256xf32>
    %cst_22 = arith.constant 0.000000e+00 : f32
    %43 = vector.broadcast %cst_22 : f32 to vector<16x256xf32>
    %44 = arith.maximumf %42, %43 : vector<16x256xf32>
    %c0_23 = arith.constant 0 : index
    %c0_24 = arith.constant 0 : index
    %45 = vector.load %arg5[%c0_23, %c0_24] : memref<1x256xf32, #tpu.memory_space<vmem>>, vector<1x256xf32>
    %46 = vector.broadcast %45 : vector<1x256xf32> to vector<16x256xf32>
    %47 = arith.mulf %44, %46 : vector<16x256xf32>
    %cst_25 = arith.constant dense<0.000000e+00> : vector<16xf32>
    %48 = vector.multi_reduction <add>, %47, %cst_25 [1] : vector<16x256xf32> to vector<16xf32>
    %49 = vector.shape_cast %48 : vector<16xf32> to vector<16x1xf32>
    %c0_26 = arith.constant 0 : index
    %50 = memref.load %arg6[%c0_26] : memref<1xf32, #tpu.memory_space<smem>>
    %51 = vector.broadcast %50 : f32 to vector<16x1xf32>
    %52 = arith.addf %49, %51 : vector<16x1xf32>
    %c0_27 = arith.constant 0 : index
    %c0_28 = arith.constant 0 : index
    %53 = vector.load %arg7[%c0_27, %c0_28] : memref<16x1xf32, #tpu.memory_space<vmem>>, vector<16x1xf32>
    tpu.vector_store %arg7[%c0_27, %c0_28], %52 {strides = array<i32>} : memref<16x1xf32, #tpu.memory_space<vmem>>, vector<16x1xf32>,
    return
  }
}

</mosaic_0001>

<llo_original>
// kernel: _critic_forward.1
$region0: #{_critic_forward.1}
  #allocation0 [shape = 'u32[]', space=smem, size = 0x4, offset = 0x4, fixed_abs, tag = 'smem constant byte address 0x4 - core index']
  #allocation1 [shape = 'u32[144,128]{1,0:T(1,128)}', space=vmem, size = 0x12000, scoped, tag = 'internal scratch']
  #allocation2 [shape = 'f32[1]{0:T(128)S(6)}', space=smem, size = 0x200, scoped, tag = 'scoped memory for _critic_forward.1']
  %s0 = inlined_call_operand.vmem [shape: f32[16,33], index: 0, kind: input, shape index: {}]
  %s1 = inlined_call_operand.vmem [shape: f32[16,4], index: 1, kind: input, shape index: {}]
  %s2 = inlined_call_operand.hbm [shape: f32[33,256], index: 2, kind: input, shape index: {}]
  %s3 = inlined_call_operand.hbm [shape: f32[256,256], index: 3, kind: input, shape index: {}]
  %s4 = inlined_call_operand.vmem [shape: f32[4,256], index: 4, kind: input, shape index: {}]
  %s5 = inlined_call_operand.vmem [shape: f32[1,256], index: 5, kind: input, shape index: {}]
  %s6 = inlined_call_operand.<no memory space> [shape: f32[1], index: 6, kind: input, shape index: {}]
  %s7 = inlined_call_operand.vmem [shape: f32[16,1], index: 7, kind: output, shape index: {}]
  %s8 = sld [smem:[#allocation0]]
  $region46: #{_critic_forward.1} parent=0
    _
  %s10 = ssub.s32 1, %s8
  %s11 = scalar_select 0, %s10, %s8
  %12 = sst [smem:[#allocation2]] %s6
  $region1: #{_critic_forward.1} parent=0
    #allocation3 [shape = 'u8[40960]{0}', space=vmem, size = 0xa000, scoped, tag = 'input window, operand 2, single buffered']
    #allocation4 [shape = 's32[1]{0}', space=sflag, size = 0x4, scoped, tag = 'scoped memory for _critic_forward.1']
    #allocation5 [shape = 'u8[262144]{0}', space=vmem, size = 0x40000, scoped, tag = 'input window, operand 3, single buffered']
    #allocation6 [shape = 's32[1]{0}', space=sflag, size = 0x4, scoped, tag = 'scoped memory for _critic_forward.1']
    %13 = vsyncpa [#allocation4], 0
    %14 = vsyncpa [#allocation6], 0
    // Predicated region
    $region2: #{_critic_forward.1} parent=1 // pred_check
      _
    $region3: #{_critic_forward.1} parent=1 // pred_check_branch
      %16 = sbr.rel (0) target = $region5
    $region4: #{_critic_forward.1} parent=1 // pred_region
      _
    $region5: #{_critic_forward.1} parent=1 // pred_fallthru
      _
    // Predicated region
    $region6: #{_critic_forward.1} parent=1 // pred_check
      _
    $region7: #{_critic_forward.1} parent=1 // pred_check_branch
      %18 = sbr.rel (0) target = $region9
    $region8: #{_critic_forward.1} parent=1 // pred_region
      _
    $region9: #{_critic_forward.1} parent=1 // pred_fallthru
      _
    // Predicated region
    $region10: #{_critic_forward.1} parent=1 // pred_check
      _
    $region11: #{_critic_forward.1} parent=1 // pred_check_branch
      %20 = sbr.rel (0) target = $region13
    $region12: #{_critic_forward.1} parent=1 // pred_region
      %s22 = ssub.s32 1280, 1280
      %23 = vsyncadd [#allocation4], %s22
      %s24 = sshll.u32 [#allocation3], 4
      %s25 = int_to_ptr.vmem [resolvable:$true] %s24
      %30 = dma.hbm_to_vmem [thread:$0]  %s2, 1280, %s25, [#allocation4], 256, 256, 16
    $region13: #{_critic_forward.1} parent=1 // pred_fallthru
      _
    // Predicated region
    $region14: #{_critic_forward.1} parent=1 // pred_check
      _
    $region15: #{_critic_forward.1} parent=1 // pred_check_branch
      %32 = sbr.rel (0) target = $region17
    $region16: #{_critic_forward.1} parent=1 // pred_region
      %s34 = ssub.s32 8192, 8192
      %35 = vsyncadd [#allocation6], %s34
      %s36 = sshll.u32 [#allocation5], 4
      %s37 = int_to_ptr.vmem [resolvable:$true] %s36
      %42 = dma.hbm_to_vmem [thread:$0]  %s3, 8192, %s37, [#allocation6], 256, 256, 16
    $region17: #{_critic_forward.1} parent=1 // pred_fallthru
      _
    // Predicated region
    $region18: #{_critic_forward.1} parent=1 // pred_check
      _
    $region19: #{_critic_forward.1} parent=1 // pred_check_branch
      %44 = sbr.rel (0) target = $region21
    $region20: #{_critic_forward.1} parent=1 // pred_region
      _
    $region21: #{_critic_forward.1} parent=1 // pred_fallthru
      _
    // Predicated region
    $region22: #{_critic_forward.1} parent=1 // pred_check
      _
    $region23: #{_critic_forward.1} parent=1 // pred_check_branch
      %46 = sbr.rel (0) target = $region25
    $region24: #{_critic_forward.1} parent=1 // pred_region
      _
    $region25: #{_critic_forward.1} parent=1 // pred_fallthru
      _
    // Predicated region
    $region26: #{_critic_forward.1} parent=1 // pred_check
      _
    $region27: #{_critic_forward.1} parent=1 // pred_check_branch
      %48 = sbr.rel (0) target = $region29
    $region28: #{_critic_forward.1} parent=1 // pred_region
      _
    $region29: #{_critic_forward.1} parent=1 // pred_fallthru
      _
    // Predicated region
    $region30: #{_critic_forward.1} parent=1 // pred_check
      _
    $region31: #{_critic_forward.1} parent=1 // pred_check_branch
      %50 = sbr.rel (0) target = $region33
    $region32: #{_critic_forward.1} parent=1 // pred_region
      %51 = dma.done [#allocation4], 1280
    $region33: #{_critic_forward.1} parent=1 // pred_fallthru
      _
    // Predicated region
    $region34: #{_critic_forward.1} parent=1 // pred_check
      _
    $region35: #{_critic_forward.1} parent=1 // pred_check_branch
      %53 = sbr.rel (0) target = $region37
    $region36: #{_critic_forward.1} parent=1 // pred_region
      %54 = dma.done [#allocation6], 8192
    $region37: #{_critic_forward.1} parent=1 // pred_fallthru
      _
    %v55 = vld [vmem:[%s1] sm:$0xff]
    %v56 = vld [vmem:[%s1 + $0x8] sm:$0xff]
    %v57 = vld [vmem:[%s4] sm:$0xff]
    %v59 = vcombine.high %v57, %v57
    %vm60 = vcmask 31744
    %v62 = vsel %vm60, %v55, 0
    %v65 = vsel %vm60, %v56, 0
    %vm67 = vcmask 1043456
    %v68 = vsel %vm67, %v57, 0
    %v70 = vsel %vm67, %v59, 0
    %72 = vmatprep.subr.mxu0 0.0
    %73 = vmatpush1.msra.mxu0 0.0
    %74 = vmatprep.subr.mxu0 0.0
    %75 = vmatpush1.msra.mxu0 0.0
    %76 = vmatprep.subr.mxu0 0.0
    %77 = vmatpush1.msra.mxu0 0.0
    %78 = vmatprep.subr.mxu0 0.0
    %79 = vmatpush1.msra.mxu0 0.0
    %80 = vmatprep.subr.mxu0 0.0
    %81 = vmatpush1.msra.mxu0 0.0
    %82 = vmatprep.subr.mxu0 0.0
    %83 = vmatpush1.msra.mxu0 0.0
    %84 = vmatprep.subr.mxu0 0.0
    %85 = vmatpush1.msra.mxu0 0.0
    %86 = vmatprep.subr.mxu0 0.0
    %87 = vmatpush1.msra.mxu0 0.0
    %88 = vmatprep.subr.mxu0 0.0
    %89 = vmatpush1.msra.mxu0 0.0
    %90 = vmatprep.subr.mxu0 0.0
    %91 = vmatpush1.msra.mxu0 0.0
    %92 = vmatprep.subr.mxu0 0.0
    %93 = vmatpush1.msra.mxu0 0.0
    %94 = vmatprep.subr.mxu0 0.0
    %95 = vmatpush1.msra.mxu0 0.0
    %96 = vmatprep.subr.mxu0 0.0
    %97 = vmatpush1.msra.mxu0 0.0
    %98 = vmatprep.subr.mxu0 0.0
    %99 = vmatpush1.msra.mxu0 0.0
    %100 = vmatprep.subr.mxu0 0.0
    %101 = vmatpush1.msra.mxu0 0.0
    %102 = vmatprep.subr.mxu0 %v70
    %103 = vmatpush1.msra.mxu0 %v68
    %104 = vmatprep.subr.mxu0 0.0
    %105 = vmatpush2.msra.mxu0 0.0
    %106 = vmatprep.subr.mxu0 0.0
    %107 = vmatpush2.msra.mxu0 0.0
    %108 = vmatprep.subr.mxu0 0.0
    %109 = vmatpush2.msra.mxu0 0.0
    %110 = vmatprep.subr.mxu0 0.0
    %111 = vmatpush2.msra.mxu0 0.0
    %112 = vmatprep.subr.mxu0 0.0
    %113 = vmatpush2.msra.mxu0 0.0
    %114 = vmatprep.subr.mxu0 0.0
    %115 = vmatpush2.msra.mxu0 0.0
    %116 = vmatprep.subr.mxu0 0.0
    %117 = vmatpush2.msra.mxu0 0.0
    %118 = vmatprep.subr.mxu0 0.0
    %119 = vmatpush2.msra.mxu0 0.0
    %120 = vmatprep.subr.mxu0 0.0
    %121 = vmatpush2.msra.mxu0 0.0
    %122 = vmatprep.subr.mxu0 0.0
    %123 = vmatpush2.msra.mxu0 0.0
    %124 = vmatprep.subr.mxu0 0.0
    %125 = vmatpush2.msra.mxu0 0.0
    %126 = vmatprep.subr.mxu0 0.0
    %127 = vmatpush2.msra.mxu0 0.0
    %128 = vmatprep.subr.mxu0 0.0
    %129 = vmatpush2.msra.mxu0 0.0
    %130 = vmatprep.subr.mxu0 0.0
    %131 = vmatpush2.msra.mxu0 0.0
    %132 = vmatprep.subr.mxu0 0.0
    %133 = vmatpush2.msra.mxu0 0.0
    %134 = vmatprep.subr.mxu0 0.0
    %135 = vmatpush2.msra.mxu0 0.0
    %136 = vmatprep.mubr.f32.mxu0 0.0
    %137 = vmatmul.mubr.f32.gmra.mxu0 %v62
    %v138 = vpop.f32.mrf.mxu0
    %v139 = vadd.f32 0.0, %v138
    %v140 = vpop.f32.mrf.mxu0
    %v141 = vadd.f32 0.0, %v140
    %142 = vmatprep.mubr.f32.mxu0 0.0
    %143 = vmatmul.mubr.f32.gmra.mxu0 %v65
    %v144 = vpop.f32.mrf.mxu0
    %v145 = vadd.f32 0.0, %v144
    %v146 = vpop.f32.mrf.mxu0
    %v147 = vadd.f32 0.0, %v146
    %148 = vdwg.mxu0
    %v149 = vld [vmem:[%s0] sm:$0xff]
    %v150 = vld [vmem:[%s0 + $0x8] sm:$0xff]
    %v151 = vld [vmem:[#allocation3] sm:$0xff]
    %v152 = vld [vmem:[#allocation3 + $0x8] sm:$0xff]
    %v153 = vld [vmem:[#allocation3 + $0x10] sm:$0xff]
    %v154 = vld [vmem:[#allocation3 + $0x18] sm:$0xff]
    %v155 = vld [vmem:[#allocation3 + $0x20] sm:$0xff]
    %v156 = vld [vmem:[#allocation3 + $0x28] sm:$0xff]
    %v157 = vld [vmem:[#allocation3 + $0x30] sm:$0xff]
    %v158 = vld [vmem:[#allocation3 + $0x38] sm:$0xff]
    %v159 = vld [vmem:[#allocation3 + $0x40] sm:$0x1]
    %v160 = vld [vmem:[#allocation3 + $0x48] sm:$0x1]
    %vm161 = vcmask 269312
    %v163 = vsel %vm161, %v149, 0
    %v166 = vsel %vm161, %v150, 0
    %vm168 = vcmask 1040384
    %v170 = vsel %vm168, %v159, 0
    %v173 = vsel %vm168, %v160, 0
    %175 = vmatprep.subr.mxu0 0.0
    %176 = vmatpush1.msra.mxu0 0.0
    %177 = vmatprep.subr.mxu0 0.0
    %178 = vmatpush1.msra.mxu0 0.0
    %179 = vmatprep.subr.mxu0 0.0
    %180 = vmatpush1.msra.mxu0 0.0
    %181 = vmatprep.subr.mxu0 0.0
    %182 = vmatpush1.msra.mxu0 0.0
    %183 = vmatprep.subr.mxu0 0.0
    %184 = vmatpush1.msra.mxu0 0.0
    %185 = vmatprep.subr.mxu0 0.0
    %186 = vmatpush1.msra.mxu0 0.0
    %187 = vmatprep.subr.mxu0 0.0
    %188 = vmatpush1.msra.mxu0 0.0
    %189 = vmatprep.subr.mxu0 0.0
    %190 = vmatpush1.msra.mxu0 0.0
    %191 = vmatprep.subr.mxu0 0.0
    %192 = vmatpush1.msra.mxu0 0.0
    %193 = vmatprep.subr.mxu0 0.0
    %194 = vmatpush1.msra.mxu0 0.0
    %195 = vmatprep.subr.mxu0 0.0
    %196 = vmatpush1.msra.mxu0 0.0
    %197 = vmatprep.subr.mxu0 %v173
    %198 = vmatpush1.msra.mxu0 %v170
    %199 = vmatprep.subr.mxu0 %v158
    %200 = vmatpush1.msra.mxu0 %v157
    %201 = vmatprep.subr.mxu0 %v156
    %202 = vmatpush1.msra.mxu0 %v155
    %203 = vmatprep.subr.mxu0 %v154
    %204 = vmatpush1.msra.mxu0 %v153
    %205 = vmatprep.subr.mxu0 %v152
    %206 = vmatpush1.msra.mxu0 %v151
    %207 = vmatprep.subr.mxu0 0.0
    %208 = vmatpush2.msra.mxu0 0.0
    %209 = vmatprep.subr.mxu0 0.0
    %210 = vmatpush2.msra.mxu0 0.0
    %211 = vmatprep.subr.mxu0 0.0
    %212 = vmatpush2.msra.mxu0 0.0
    %213 = vmatprep.subr.mxu0 0.0
    %214 = vmatpush2.msra.mxu0 0.0
    %215 = vmatprep.subr.mxu0 0.0
    %216 = vmatpush2.msra.mxu0 0.0
    %217 = vmatprep.subr.mxu0 0.0
    %218 = vmatpush2.msra.mxu0 0.0
    %219 = vmatprep.subr.mxu0 0.0
    %220 = vmatpush2.msra.mxu0 0.0
    %221 = vmatprep.subr.mxu0 0.0
    %222 = vmatpush2.msra.mxu0 0.0
    %223 = vmatprep.subr.mxu0 0.0
    %224 = vmatpush2.msra.mxu0 0.0
    %225 = vmatprep.subr.mxu0 0.0
    %226 = vmatpush2.msra.mxu0 0.0
    %227 = vmatprep.subr.mxu0 0.0
    %228 = vmatpush2.msra.mxu0 0.0
    %229 = vmatprep.subr.mxu0 0.0
    %230 = vmatpush2.msra.mxu0 0.0
    %231 = vmatprep.subr.mxu0 0.0
    %232 = vmatpush2.msra.mxu0 0.0
    %233 = vmatprep.subr.mxu0 0.0
    %234 = vmatpush2.msra.mxu0 0.0
    %235 = vmatprep.subr.mxu0 0.0
    %236 = vmatpush2.msra.mxu0 0.0
    %237 = vmatprep.subr.mxu0 0.0
    %238 = vmatpush2.msra.mxu0 0.0
    %239 = vmatprep.mubr.f32.mxu0 0.0
    %240 = vmatmul.mubr.f32.gmra.mxu0 %v163
    %v241 = vpop.f32.mrf.mxu0
    %v242 = vadd.f32 0.0, %v241
    %v243 = vpop.f32.mrf.mxu0
    %v244 = vadd.f32 0.0, %v243
    %245 = vmatprep.mubr.f32.mxu0 0.0
    %246 = vmatmul.mubr.f32.gmra.mxu0 %v166
    %v247 = vpop.f32.mrf.mxu0
    %v248 = vadd.f32 0.0, %v247
    %v249 = vpop.f32.mrf.mxu0
    %v250 = vadd.f32 0.0, %v249
    %251 = vdwg.mxu0
    %v252 = vadd.f32 %v242, %v248
    %v253 = vrot.slane %v252, 4
    %v254 = vadd.f32 %v252, %v253
    %v255 = vrot.slane %v254, 2
    %v256 = vadd.f32 %v254, %v255
    %v257 = vrot.slane %v256, 1
    %v258 = vadd.f32 %v256, %v257
    %v259 = vadd.f32 %v244, %v250
    %v260 = vrot.slane %v259, 4
    %v261 = vadd.f32 %v259, %v260
    %v262 = vrot.slane %v261, 2
    %v263 = vadd.f32 %v261, %v262
    %v264 = vrot.slane %v263, 1
    %v265 = vadd.f32 %v263, %v264
    %v266 = vrcp.pop 16.0
    %v267 = vmul.f32 %v258, %v266
    %v268 = vmul.f32 %v265, %v266
    %v269 = vsub.f32 %v242, %v267
    %v270 = vsub.f32 %v244, %v268
    %v271 = vsub.f32 %v248, %v267
    %v272 = vsub.f32 %v250, %v268
    %v273 = vmul.f32 %v269, %v269
    %v274 = vmul.f32 %v270, %v270
    %v275 = vmul.f32 %v271, %v271
    %v276 = vmul.f32 %v272, %v272
    %v277 = vadd.f32 %v273, %v275
    %v278 = vrot.slane %v277, 4
    %v279 = vadd.f32 %v277, %v278
    %v280 = vrot.slane %v279, 2
    %v281 = vadd.f32 %v279, %v280
    %v282 = vrot.slane %v281, 1
    %v283 = vadd.f32 %v281, %v282
    %v284 = vadd.f32 %v274, %v276
    %v285 = vrot.slane %v284, 4
    %v286 = vadd.f32 %v284, %v285
    %v287 = vrot.slane %v286, 2
    %v288 = vadd.f32 %v286, %v287
    %v289 = vrot.slane %v288, 1
    %v290 = vadd.f32 %v288, %v289
    %v291 = vmul.f32 %v283, %v266
    %v292 = vmul.f32 %v290, %v266
    %v293 = vadd.f32 %v291, 1e-05
    %v294 = vadd.f32 %v292, 1e-05
    %v295 = vrsqrt.pop %v293
    %v296 = vrsqrt.pop %v294
    %v297 = vmul.f32 %v269, %v295
    %v298 = vmul.f32 %v270, %v296
    %v299 = vmul.f32 %v271, %v295
    %v300 = vmul.f32 %v272, %v296
    %v301 = vmax.f32 %v297, 0.0
    %v302 = vmax.f32 %v298, 0.0
    %v303 = vmax.f32 %v299, 0.0
    %v304 = vmax.f32 %v300, 0.0
    %v305 = vld [vmem:[#allocation5] sm:$0xff]
    %v306 = vld [vmem:[#allocation5 + $0x8] sm:$0xff]
    %v307 = vld [vmem:[#allocation5 + $0x10] sm:$0xff]
    %v308 = vld [vmem:[#allocation5 + $0x18] sm:$0xff]
    %v309 = vld [vmem:[#allocation5 + $0x20] sm:$0xff]
    %v310 = vld [vmem:[#allocation5 + $0x28] sm:$0xff]
    %v311 = vld [vmem:[#allocation5 + $0x30] sm:$0xff]
    %v312 = vld [vmem:[#allocation5 + $0x38] sm:$0xff]
    %v313 = vld [vmem:[#allocation5 + $0x40] sm:$0xff]
    %v314 = vld [vmem:[#allocation5 + $0x48] sm:$0xff]
    %v315 = vld [vmem:[#allocation5 + $0x50] sm:$0xff]
    %v316 = vld [vmem:[#allocation5 + $0x58] sm:$0xff]
    %v317 = vld [vmem:[#allocation5 + $0x60] sm:$0xff]
    %v318 = vld [vmem:[#allocation5 + $0x68] sm:$0xff]
    %v319 = vld [vmem:[#allocation5 + $0x70] sm:$0xff]
    %v320 = vld [vmem:[#allocation5 + $0x78] sm:$0xff]
    %v321 = vld [vmem:[#allocation5 + $0x80] sm:$0xff]
    %v322 = vld [vmem:[#allocation5 + $0x88] sm:$0xff]
    %v323 = vld [vmem:[#allocation5 + $0x90] sm:$0xff]
    %v324 = vld [vmem:[#allocation5 + $0x98] sm:$0xff]
    %v325 = vld [vmem:[#allocation5 + $0xa0] sm:$0xff]
    %v326 = vld [vmem:[#allocation5 + $0xa8] sm:$0xff]
    %v327 = vld [vmem:[#allocation5 + $0xb0] sm:$0xff]
    %v328 = vld [vmem:[#allocation5 + $0xb8] sm:$0xff]
    %v329 = vld [vmem:[#allocation5 + $0xc0] sm:$0xff]
    %v330 = vld [vmem:[#allocation5 + $0xc8] sm:$0xff]
    %v331 = vld [vmem:[#allocation5 + $0xd0] sm:$0xff]
    %v332 = vld [vmem:[#allocation5 + $0xd8] sm:$0xff]
    %v333 = vld [vmem:[#allocation5 + $0xe0] sm:$0xff]
    %v334 = vld [vmem:[#allocation5 + $0xe8] sm:$0xff]
    %v335 = vld [vmem:[#allocation5 + $0xf0] sm:$0xff]
    %v336 = vld [vmem:[#allocation5 + $0xf8] sm:$0xff]
    %v337 = vld [vmem:[#allocation5 + $0x100] sm:$0xff]
    %v338 = vld [vmem:[#allocation5 + $0x108] sm:$0xff]
    %v339 = vld [vmem:[#allocation5 + $0x110] sm:$0xff]
    %v340 = vld [vmem:[#allocation5 + $0x118] sm:$0xff]
    %v341 = vld [vmem:[#allocation5 + $0x120] sm:$0xff]
    %v342 = vld [vmem:[#allocation5 + $0x128] sm:$0xff]
    %v343 = vld [vmem:[#allocation5 + $0x130] sm:$0xff]
    %v344 = vld [vmem:[#allocation5 + $0x138] sm:$0xff]
    %v345 = vld [vmem:[#allocation5 + $0x140] sm:$0xff]
    %v346 = vld [vmem:[#allocation5 + $0x148] sm:$0xff]
    %v347 = vld [vmem:[#allocation5 + $0x150] sm:$0xff]
    %v348 = vld [vmem:[#allocation5 + $0x158] sm:$0xff]
    %v349 = vld [vmem:[#allocation5 + $0x160] sm:$0xff]
    %v350 = vld [vmem:[#allocation5 + $0x168] sm:$0xff]
    %v351 = vld [vmem:[#allocation5 + $0x170] sm:$0xff]
    %v352 = vld [vmem:[#allocation5 + $0x178] sm:$0xff]
    %v353 = vld [vmem:[#allocation5 + $0x180] sm:$0xff]
    %v354 = vld [vmem:[#allocation5 + $0x188] sm:$0xff]
    %v355 = vld [vmem:[#allocation5 + $0x190] sm:$0xff]
    %v356 = vld [vmem:[#allocation5 + $0x198] sm:$0xff]
    %v357 = vld [vmem:[#allocation5 + $0x1a0] sm:$0xff]
    %v358 = vld [vmem:[#allocation5 + $0x1a8] sm:$0xff]
    %v359 = vld [vmem:[#allocation5 + $0x1b0] sm:$0xff]
    %v360 = vld [vmem:[#allocation5 + $0x1b8] sm:$0xff]
    %v361 = vld [vmem:[#allocation5 + $0x1c0] sm:$0xff]
    %v362 = vld [vmem:[#allocation5 + $0x1c8] sm:$0xff]
    %v363 = vld [vmem:[#allocation5 + $0x1d0] sm:$0xff]
    %v364 = vld [vmem:[#allocation5 + $0x1d8] sm:$0xff]
    %v365 = vld [vmem:[#allocation5 + $0x1e0] sm:$0xff]
    %v366 = vld [vmem:[#allocation5 + $0x1e8] sm:$0xff]
    %v367 = vld [vmem:[#allocation5 + $0x1f0] sm:$0xff]
    %v368 = vld [vmem:[#allocation5 + $0x1f8] sm:$0xff]
    %369 = vmatprep.subr.mxu0 %v336
    %370 = vmatpush1.msra.mxu0 %v335
    %371 = vmatprep.subr.mxu0 %v334
    %372 = vmatpush1.msra.mxu0 %v333
    %373 = vmatprep.subr.mxu0 %v332
    %374 = vmatpush1.msra.mxu0 %v331
    %375 = vmatprep.subr.mxu0 %v330
    %376 = vmatpush1.msra.mxu0 %v329
    %377 = vmatprep.subr.mxu0 %v328
    %378 = vmatpush1.msra.mxu0 %v327
    %379 = vmatprep.subr.mxu0 %v326
    %380 = vmatpush1.msra.mxu0 %v325
    %381 = vmatprep.subr.mxu0 %v324
    %382 = vmatpush1.msra.mxu0 %v323
    %383 = vmatprep.subr.mxu0 %v322
    %384 = vmatpush1.msra.mxu0 %v321
    %385 = vmatprep.subr.mxu0 %v320
    %386 = vmatpush1.msra.mxu0 %v319
    %387 = vmatprep.subr.mxu0 %v318
    %388 = vmatpush1.msra.mxu0 %v317
    %389 = vmatprep.subr.mxu0 %v316
    %390 = vmatpush1.msra.mxu0 %v315
    %391 = vmatprep.subr.mxu0 %v314
    %392 = vmatpush1.msra.mxu0 %v313
    %393 = vmatprep.subr.mxu0 %v312
    %394 = vmatpush1.msra.mxu0 %v311
    %395 = vmatprep.subr.mxu0 %v310
    %396 = vmatpush1.msra.mxu0 %v309
    %397 = vmatprep.subr.mxu0 %v308
    %398 = vmatpush1.msra.mxu0 %v307
    %399 = vmatprep.subr.mxu0 %v306
    %400 = vmatpush1.msra.mxu0 %v305
    %401 = vmatprep.subr.mxu0 %v368
    %402 = vmatpush2.msra.mxu0 %v367
    %403 = vmatprep.subr.mxu0 %v366
    %404 = vmatpush2.msra.mxu0 %v365
    %405 = vmatprep.subr.mxu0 %v364
    %406 = vmatpush2.msra.mxu0 %v363
    %407 = vmatprep.subr.mxu0 %v362
    %408 = vmatpush2.msra.mxu0 %v361
    %409 = vmatprep.subr.mxu0 %v360
    %410 = vmatpush2.msra.mxu0 %v359
    %411 = vmatprep.subr.mxu0 %v358
    %412 = vmatpush2.msra.mxu0 %v357
    %413 = vmatprep.subr.mxu0 %v356
    %414 = vmatpush2.msra.mxu0 %v355
    %415 = vmatprep.subr.mxu0 %v354
    %416 = vmatpush2.msra.mxu0 %v353
    %417 = vmatprep.subr.mxu0 %v352
    %418 = vmatpush2.msra.mxu0 %v351
    %419 = vmatprep.subr.mxu0 %v350
    %420 = vmatpush2.msra.mxu0 %v349
    %421 = vmatprep.subr.mxu0 %v348
    %422 = vmatpush2.msra.mxu0 %v347
    %423 = vmatprep.subr.mxu0 %v346
    %424 = vmatpush2.msra.mxu0 %v345
    %425 = vmatprep.subr.mxu0 %v344
    %426 = vmatpush2.msra.mxu0 %v343
    %427 = vmatprep.subr.mxu0 %v342
    %428 = vmatpush2.msra.mxu0 %v341
    %429 = vmatprep.subr.mxu0 %v340
    %430 = vmatpush2.msra.mxu0 %v339
    %431 = vmatprep.subr.mxu0 %v338
    %432 = vmatpush2.msra.mxu0 %v337
    %433 = vmatprep.mubr.f32.mxu0 %v302
    %434 = vmatmul.mubr.f32.gmra.mxu0 %v301
    %v435 = vpop.f32.mrf.mxu0
    %v436 = vadd.f32 %v139, %v435
    %v437 = vpop.f32.mrf.mxu0
    %v438 = vadd.f32 %v141, %v437
    %439 = vmatprep.mubr.f32.mxu0 %v304
    %440 = vmatmul.mubr.f32.gmra.mxu0 %v303
    %v441 = vpop.f32.mrf.mxu0
    %v442 = vadd.f32 %v145, %v441
    %v443 = vpop.f32.mrf.mxu0
    %v444 = vadd.f32 %v147, %v443
    %445 = vdwg.mxu0
    %v446 = vadd.f32 %v436, %v442
    %v447 = vrot.slane %v446, 4
    %v448 = vadd.f32 %v446, %v447
    %v449 = vrot.slane %v448, 2
    %v450 = vadd.f32 %v448, %v449
    %v451 = vrot.slane %v450, 1
    %v452 = vadd.f32 %v450, %v451
    %v453 = vadd.f32 %v438, %v444
    %v454 = vrot.slane %v453, 4
    %v455 = vadd.f32 %v453, %v454
    %v456 = vrot.slane %v455, 2
    %v457 = vadd.f32 %v455, %v456
    %v458 = vrot.slane %v457, 1
    %v459 = vadd.f32 %v457, %v458
    %v460 = vmul.f32 %v452, %v266
    %v461 = vmul.f32 %v459, %v266
    %v462 = vsub.f32 %v436, %v460
    %v463 = vsub.f32 %v438, %v461
    %v464 = vsub.f32 %v442, %v460
    %v465 = vsub.f32 %v444, %v461
    %v466 = vmul.f32 %v462, %v462
    %v467 = vmul.f32 %v463, %v463
    %v468 = vmul.f32 %v464, %v464
    %v469 = vmul.f32 %v465, %v465
    %v470 = vadd.f32 %v466, %v468
    %v471 = vrot.slane %v470, 4
    %v472 = vadd.f32 %v470, %v471
    %v473 = vrot.slane %v472, 2
    %v474 = vadd.f32 %v472, %v473
    %v475 = vrot.slane %v474, 1
    %v476 = vadd.f32 %v474, %v475
    %v477 = vadd.f32 %v467, %v469
    %v478 = vrot.slane %v477, 4
    %v479 = vadd.f32 %v477, %v478
    %v480 = vrot.slane %v479, 2
    %v481 = vadd.f32 %v479, %v480
    %v482 = vrot.slane %v481, 1
    %v483 = vadd.f32 %v481, %v482
    %v484 = vmul.f32 %v476, %v266
    %v485 = vmul.f32 %v483, %v266
    %v486 = vadd.f32 %v484, 1e-05
    %v487 = vadd.f32 %v485, 1e-05
    %v488 = vrsqrt.pop %v486
    %v489 = vrsqrt.pop %v487
    %v490 = vmul.f32 %v462, %v488
    %v491 = vmul.f32 %v463, %v489
    %v492 = vmul.f32 %v464, %v488
    %v493 = vmul.f32 %v465, %v489
    %v494 = vmax.f32 %v490, 0.0
    %v495 = vmax.f32 %v491, 0.0
    %v496 = vmax.f32 %v492, 0.0
    %v497 = vmax.f32 %v493, 0.0
    %v498 = vld [vmem:[%s5] sm:$0x3]
    %v500 = vlaneseq
    %v501 = vshrl.u32 %v500, 7
    %v502 = vsub.s32 0, %v501
    %v503 = vrot.slane %v498, %v502
    %v504 = vlaneseq
    %v505 = vshrl.u32 %v504, 7
    %v506 = vsub.s32 1, %v505
    %v507 = vrot.slane %v498, %v506
    %v510 = vmul.f32 %v494, %v503
    %v511 = vmul.f32 %v495, %v507
    %v512 = vmul.f32 %v496, %v503
    %v513 = vmul.f32 %v497, %v507
    %v514 = vadd.f32 %v510, %v511
    %515 = vadd.xlane.f32.xlu0 %v514
    %v516 = vpop.xlane.xlu0 %515
    %v517 = vadd.f32 %v512, %v513
    %518 = vadd.xlane.f32.xlu0 %v517
    %v519 = vpop.xlane.xlu0 %518
    %s520 = sld [smem:[#allocation2]]
    %v521 = vstv %s520
    %v522 = vadd.f32 %v516, %v521
    %v523 = vadd.f32 %v519, %v521
    %vm524 = vcmask 7168
    %525 = vst.msk [vmem:[%s7] sm:$0xff] %vm524, %v522
    %526 = vst.msk [vmem:[%s7 + $0x8] sm:$0xff] %vm524, %v523
    // Predicated region
    $region38: #{_critic_forward.1} parent=1 // pred_check
      _
    $region39: #{_critic_forward.1} parent=1 // pred_check_branch
      %528 = sbr.rel (0) target = $region41
    $region40: #{_critic_forward.1} parent=1 // pred_region
      _
    $region41: #{_critic_forward.1} parent=1 // pred_fallthru
      _
    // Predicated region
    $region42: #{_critic_forward.1} parent=1 // pred_check
      _
    $region43: #{_critic_forward.1} parent=1 // pred_check_branch
      %530 = sbr.rel (0) target = $region45
    $region44: #{_critic_forward.1} parent=1 // pred_region
      _
    $region45: #{_critic_forward.1} parent=1 // pred_fallthru
      _
    %531 = vsyncpa [#allocation4], 1
    %532 = vsyncpa [#allocation6], 1

</llo_original>
